<compile_context>
chip_gen: v7x
topology: tpu7x:2x2x1
jax: 0.10.0
libtpu: 0.0.40
codegen_flags: <defaults>
</compile_context>

<pallas_src>
import functools

import jax
import jax.numpy as jnp
from jax.experimental import pallas as pl
from jax.experimental.pallas import tpu as pltpu


def _round_up(x, m):
    return (x + m - 1) // m * m


# ----------------------------------------------------------------------------
# Fused kernel: one batch element per grid step, two ChebConv layers,
# Chebyshev recursion on z_k = T_k(L) @ x, fused-k weight contraction,
# bias + ReLU, lane-padded output.
# ----------------------------------------------------------------------------
def chebnet_batch_kernel(l_ref, x_ref, w1_ref, b1_ref, w2_ref, b2_ref, o_ref,
                         *, num_terms):
    """Fused 2-layer ChebConv for one batch element.

    l_ref  : [N, N]                    graph Laplacian (grid-constant)
    x_ref  : [1, N, in_c]              this batch element's node features
    w1_ref : [(K+1)*in_c, hid]         layer-1 weights, k folded into rows
    b1_ref : [1, hid]                  layer-1 bias
    w2_ref : [(K+1)*hid, out_pad]      layer-2 weights, k folded, lane-padded
    b2_ref : [1, out_pad]              layer-2 bias, lane-padded with zeros
    o_ref  : [1, N, out_pad]           lane-dense output slab
    """
    lap = l_ref[...]
    two_lap = lap + lap  # 2L once; reused by both layers and every k >= 2

    def cheb_layer(z0, w_cat_ref, b_ref):
        # z_0 = x, z_1 = L x, z_k = 2 L z_{k-1} - z_{k-2}; the k-loop is fully
        # unrolled (num_terms is a Python int).  All products use f32
        # accumulation on the MXU.
        zs = [z0]
        z_km2 = z_km1 = z0
        for k in range(1, num_terms):
            if k == 1:
                z = jnp.dot(lap, z0, preferred_element_type=jnp.float32)
            else:
                z = (jnp.dot(two_lap, z_km1,
                             preferred_element_type=jnp.float32) - z_km2)
            zs.append(z)
            z_km2, z_km1 = z_km1, z
        # Fold k into the contraction axis: one deep matmul per layer.
        z_cat = zs[0] if num_terms == 1 else jnp.concatenate(zs, axis=-1)
        h = jnp.dot(z_cat, w_cat_ref[...], preferred_element_type=jnp.float32)
        return jnp.maximum(h + b_ref[...], 0.0)

    x = x_ref[0]                                   # [N, in_c]
    h = cheb_layer(x, w1_ref, b1_ref)              # [N, hid]
    o_ref[0] = cheb_layer(h, w2_ref, b2_ref).astype(o_ref.dtype)


# ----------------------------------------------------------------------------
# JAX-side glue: Laplacian, parameter init/plumbing, kernel wrapper.
# ----------------------------------------------------------------------------
def get_laplacian(graph):
    # L = I - D^{-1/2} A D^{-1/2}, with a zero-degree guard.
    # NOTE: matches the PyTorch spec (no 2L/lambda_max - I rescaling).
    n = graph.shape[0]
    deg = jnp.sum(graph, axis=-1)
    safe = jnp.where(deg > 0.0, deg, 1.0)
    d_inv_sqrt = jnp.where(deg > 0.0, safe ** -0.5, 0.0)
    norm_adj = (d_inv_sqrt[:, None] * graph) * d_inv_sqrt[None, :]
    return jnp.eye(n, dtype=graph.dtype) - norm_adj


def xavier_normal(key, k_plus_1, in_c, out_c):
    # PyTorch xavier_normal_ on shape (K+1, 1, in_c, out_c):
    # fan_in = 1 * in_c * out_c ; fan_out = (K+1) * in_c * out_c
    fan_in = in_c * out_c
    fan_out = k_plus_1 * in_c * out_c
    std = (2.0 / (fan_in + fan_out)) ** 0.5
    return std * jax.random.normal(key, (k_plus_1, 1, in_c, out_c),
                                   dtype=jnp.float32)


def init_chebnet_params(key, in_c, hid_c, out_c, K):
    k1, k2 = jax.random.split(key)
    return {
        "w1": xavier_normal(k1, K + 1, in_c, hid_c),   # [K+1, 1, in_c, hid_c]
        "b1": jnp.zeros((1, 1, hid_c), jnp.float32),
        "w2": xavier_normal(k2, K + 1, hid_c, out_c),  # [K+1, 1, hid_c, out_c]
        "b2": jnp.zeros((1, 1, out_c), jnp.float32),
    }


def _estimate_vmem_bytes(N, in_c, hid_c, out_pad, num_terms):
    """Rough per-core VMEM need: L + 2L, resident weights, double-buffered
    x/out blocks, z-concat slabs and live values, with 2x headroom."""
    f32 = 4
    resident = (2 * N * N
                + num_terms * in_c * hid_c + hid_c
                + num_terms * hid_c * out_pad + out_pad)
    per_step = 2 * (N * in_c + N * out_pad)          # double-buffered blocks
    working = N * (num_terms * (in_c + hid_c)        # concatenated z slabs
                   + 4 * max(hid_c, out_pad))        # live z / acc headroom
    return (resident + per_step + working) * f32 * 2


def chebnet_forward(params, graph, flow_x, K):
    """graph: [N, N];  flow_x: [B, N, H, D]  ->  output: [B, N, 1, out_c]"""
    B, N = flow_x.shape[0], flow_x.shape[1]
    x = flow_x.reshape(B, N, -1).astype(jnp.float32)     # natural [B, N, in_c]
    in_c = x.shape[-1]
    hid_c = params["w1"].shape[-1]
    out_c = params["w2"].shape[-1]
    num_terms = K + 1
    out_pad = _round_up(max(out_c, 1), 128)              # lane-dense writeback

    lap = get_laplacian(graph.astype(jnp.float32))        # [N, N]

    # Fold k into the weight contraction axis (tiny host-side reshapes):
    #   W_cat[k*C_in + c, o] = W[k, c, o]  matches z_cat column order.
    w1_cat = params["w1"][:, 0].reshape(num_terms * in_c, hid_c)
    b1_row = params["b1"].reshape(1, hid_c)
    w2 = params["w2"][:, 0]                                # [K+1, hid, out_c]
    w2_pad = jnp.pad(w2, ((0, 0), (0, 0), (0, out_pad - out_c)))
    w2_cat = w2_pad.reshape(num_terms * hid_c, out_pad)
    b2_row = jnp.pad(params["b2"].reshape(1, out_c),
                     ((0, 0), (0, out_pad - out_c)))

    vmem_limit = min(64 << 20,
                     max(16 << 20,
                         _estimate_vmem_bytes(N, in_c, hid_c, out_pad,
                                              num_terms)))

    out_slab = pl.pallas_call(
        functools.partial(chebnet_batch_kernel, num_terms=num_terms),
        out_shape=jax.ShapeDtypeStruct((B, N, out_pad), jnp.float32),
        grid_spec=pltpu.PrefetchScalarGridSpec(
            num_scalar_prefetch=0,
            grid=(B,),
            in_specs=[
                pl.BlockSpec((N, N), lambda b: (0, 0)),            # L (resident)
                pl.BlockSpec((1, N, in_c), lambda b: (b, 0, 0)),   # x_b
                pl.BlockSpec((num_terms * in_c, hid_c), lambda b: (0, 0)),
                pl.BlockSpec((1, hid_c), lambda b: (0, 0)),
                pl.BlockSpec((num_terms * hid_c, out_pad), lambda b: (0, 0)),
                pl.BlockSpec((1, out_pad), lambda b: (0, 0)),
            ],
            out_specs=pl.BlockSpec((1, N, out_pad), lambda b: (b, 0, 0)),
        ),
        compiler_params=pltpu.CompilerParams(
            dimension_semantics=("parallel",),     # batch steps -> 2 TCs on v7x
            vmem_limit_bytes=int(vmem_limit),
        ),
    )(lap, x, w1_cat, b1_row, w2_cat, b2_row)

    out = out_slab[:, :, :out_c]                   # drop the lane padding
    return out[:, :, None, :]                      # unsqueeze(2)


# ----------------------------------------------------------------------------
# Pure-JAX reference (mirrors the PyTorch code) for a correctness check.
# ----------------------------------------------------------------------------
def chebnet_reference(params, graph, flow_x, K):
    B, N = flow_x.shape[0], flow_x.shape[1]
    x = flow_x.reshape(B, N, -1).astype(jnp.float32)
    lap = get_laplacian(graph.astype(jnp.float32))

    polys = [jnp.eye(N, dtype=jnp.float32)]
    if K + 1 > 1:
        polys.append(lap)
        for _ in range(2, K + 1):
            polys.append(2.0 * (lap @ polys[-1]) - polys[-2])
    mul_l = jnp.stack(polys)[:, None]                       # [K+1, 1, N, N]

    def conv(xin, w, b):
        r = jnp.matmul(mul_l, xin)                          # [K+1, B, N, C_in]
        r = jnp.matmul(r, w)                                # [K+1, B, N, C_out]
        return jnp.sum(r, axis=0) + b

    o1 = jax.nn.relu(conv(x, params["w1"], params["b1"]))
    o2 = jax.nn.relu(conv(o1, params["w2"], params["b2"]))
    return o2[:, :, None, :]


if __name__ == "__main__":
    key = jax.random.PRNGKey(0)
    kg, kx, kp = jax.random.split(key, 3)

    # B=2 batches, N=16 nodes, history H=6, feature-dim D=1
    # -> in_c = 6, hid_c = 32, out_c = 2, Chebyshev order K = 3 (K+1 = 4 terms)
    B, N, H, D = 2, 16, 6, 1
    in_c, hid_c, out_c, K = H * D, 32, 2, 3

    # symmetric positive adjacency with self-loops (degrees > 0)
    a = jax.random.uniform(kg, (N, N), dtype=jnp.float32)
    graph = 0.5 * (a + a.T) + jnp.eye(N, dtype=jnp.float32)

    flow_x = jax.random.normal(kx, (B, N, H, D), dtype=jnp.float32)
    params = init_chebnet_params(kp, in_c, hid_c, out_c, K)

    out = jax.block_until_ready(chebnet_forward(params, graph, flow_x, K))
    ref = jax.block_until_ready(chebnet_reference(params, graph, flow_x, K))

    assert out.shape == (B, N, 1, out_c), out.shape
    assert jnp.allclose(out, ref, rtol=1e-4, atol=1e-4), (
        float(jnp.max(jnp.abs(out - ref))))
    print("KERNEL_OK")
</pallas_src>

<mosaic_0001>
module attributes {stable_mosaic.version = 11 : i64} {
  func.func @chebnet_batch_kernel(%arg0: i32, %arg1: memref<16x16xf32, #tpu.memory_space<vmem>>, %arg2: memref<1x16x6xf32, #tpu.memory_space<vmem>>, %arg3: memref<24x32xf32, #tpu.memory_space<vmem>>, %arg4: memref<1x32xf32, #tpu.memory_space<vmem>>, %arg5: memref<128x128xf32, #tpu.memory_space<vmem>>, %arg6: memref<1x128xf32, #tpu.memory_space<vmem>>, %arg7: memref<1x16x128xf32, #tpu.memory_space<vmem>>) attributes {dimension_semantics = [#tpu.dimension_semantics<parallel>], iteration_bounds = array<i64: 2>, scalar_prefetch = 0 : i64, scratch_operands = 0 : i64, tpu.core_type = #tpu.core_type<tc>, window_params = [{pipeline_mode = #tpu.pipeline_mode<synchronous>, transform_indices = @transform_0, window_bounds = array<i64: 16, 16>}, {transform_indices = @transform_1, window_bounds = array<i64: 1, 16, 6>}, {pipeline_mode = #tpu.pipeline_mode<synchronous>, transform_indices = @transform_2, window_bounds = array<i64: 24, 32>}, {pipeline_mode = #tpu.pipeline_mode<synchronous>, transform_indices = @transform_3, window_bounds = array<i64: 1, 32>}, {pipeline_mode = #tpu.pipeline_mode<synchronous>, transform_indices = @transform_4, window_bounds = array<i64: 128, 128>}, {pipeline_mode = #tpu.pipeline_mode<synchronous>, transform_indices = @transform_5, window_bounds = array<i64: 1, 128>}, {transform_indices = @transform_6, window_bounds = array<i64: 1, 16, 128>}]} {
    %c0 = arith.constant 0 : index
    %c0_0 = arith.constant 0 : index
    %0 = vector.load %arg1[%c0, %c0_0] : memref<16x16xf32, #tpu.memory_space<vmem>>, vector<16x16xf32>
    %1 = arith.addf %0, %0 : vector<16x16xf32>
    %c0_1 = arith.constant 0 : index
    %c0_2 = arith.constant 0 : index
    %c0_3 = arith.constant 0 : index
    %2 = vector.load %arg2[%c0_1, %c0_2, %c0_3] : memref<1x16x6xf32, #tpu.memory_space<vmem>>, vector<1x16x6xf32>
    %3 = vector.shape_cast %2 : vector<1x16x6xf32> to vector<16x6xf32>
    %cst = arith.constant dense<0.000000e+00> : vector<16x6xf32>
    %4 = tpu.matmul %0, %3, %cst {dimension_numbers = #tpu.dot_dimension_numbers<[1], [0], [0], [1], [0, 0, 1, 1], [], []>} : vector<16x16xf32>, vector<16x6xf32>, vector<16x6xf32> -> vector<16x6xf32>
    %cst_4 = arith.constant dense<0.000000e+00> : vector<16x6xf32>
    %5 = tpu.matmul %1, %4, %cst_4 {dimension_numbers = #tpu.dot_dimension_numbers<[1], [0], [0], [1], [0, 0, 1, 1], [], []>} : vector<16x16xf32>, vector<16x6xf32>, vector<16x6xf32> -> vector<16x6xf32>
    %6 = arith.subf %5, %3 : vector<16x6xf32>
    %cst_5 = arith.constant dense<0.000000e+00> : vector<16x6xf32>
    %7 = tpu.matmul %1, %6, %cst_5 {dimension_numbers = #tpu.dot_dimension_numbers<[1], [0], [0], [1], [0, 0, 1, 1], [], []>} : vector<16x16xf32>, vector<16x6xf32>, vector<16x6xf32> -> vector<16x6xf32>
    %8 = arith.subf %7, %4 : vector<16x6xf32>
    %9 = tpu.concatenate %3, %4, %6, %8 in 1 : vector<16x6xf32>, vector<16x6xf32>, vector<16x6xf32>, vector<16x6xf32> -> vector<16x24xf32>
    %c0_6 = arith.constant 0 : index
    %c0_7 = arith.constant 0 : index
    %10 = vector.load %arg3[%c0_6, %c0_7] : memref<24x32xf32, #tpu.memory_space<vmem>>, vector<24x32xf32>
    %cst_8 = arith.constant dense<0.000000e+00> : vector<16x32xf32>
    %11 = tpu.matmul %9, %10, %cst_8 {dimension_numbers = #tpu.dot_dimension_numbers<[1], [0], [0], [1], [0, 0, 1, 1], [], []>} : vector<16x24xf32>, vector<24x32xf32>, vector<16x32xf32> -> vector<16x32xf32>
    %c0_9 = arith.constant 0 : index
    %c0_10 = arith.constant 0 : index
    %12 = vector.load %arg4[%c0_9, %c0_10] : memref<1x32xf32, #tpu.memory_space<vmem>>, vector<1x32xf32>
    %13 = vector.broadcast %12 : vector<1x32xf32> to vector<16x32xf32>
    %14 = arith.addf %11, %13 : vector<16x32xf32>
    %cst_11 = arith.constant 0.000000e+00 : f32
    %15 = vector.broadcast %cst_11 : f32 to vector<16x32xf32>
    %16 = arith.maximumf %14, %15 : vector<16x32xf32>
    %cst_12 = arith.constant dense<0.000000e+00> : vector<16x32xf32>
    %17 = tpu.matmul %0, %16, %cst_12 {dimension_numbers = #tpu.dot_dimension_numbers<[1], [0], [0], [1], [0, 0, 1, 1], [], []>} : vector<16x16xf32>, vector<16x32xf32>, vector<16x32xf32> -> vector<16x32xf32>
    %cst_13 = arith.constant dense<0.000000e+00> : vector<16x32xf32>
    %18 = tpu.matmul %1, %17, %cst_13 {dimension_numbers = #tpu.dot_dimension_numbers<[1], [0], [0], [1], [0, 0, 1, 1], [], []>} : vector<16x16xf32>, vector<16x32xf32>, vector<16x32xf32> -> vector<16x32xf32>
    %19 = arith.subf %18, %16 : vector<16x32xf32>
    %cst_14 = arith.constant dense<0.000000e+00> : vector<16x32xf32>
    %20 = tpu.matmul %1, %19, %cst_14 {dimension_numbers = #tpu.dot_dimension_numbers<[1], [0], [0], [1], [0, 0, 1, 1], [], []>} : vector<16x16xf32>, vector<16x32xf32>, vector<16x32xf32> -> vector<16x32xf32>
    %21 = arith.subf %20, %17 : vector<16x32xf32>
    %22 = tpu.concatenate %16, %17, %19, %21 in 1 : vector<16x32xf32>, vector<16x32xf32>, vector<16x32xf32>, vector<16x32xf32> -> vector<16x128xf32>
    %c0_15 = arith.constant 0 : index
    %c0_16 = arith.constant 0 : index
    %23 = vector.load %arg5[%c0_15, %c0_16] : memref<128x128xf32, #tpu.memory_space<vmem>>, vector<128x128xf32>
    %cst_17 = arith.constant dense<0.000000e+00> : vector<16x128xf32>
    %24 = tpu.matmul %22, %23, %cst_17 {dimension_numbers = #tpu.dot_dimension_numbers<[1], [0], [0], [1], [0, 0, 1, 1], [], []>} : vector<16x128xf32>, vector<128x128xf32>, vector<16x128xf32> -> vector<16x128xf32>
    %c0_18 = arith.constant 0 : index
    %c0_19 = arith.constant 0 : index
    %25 = vector.load %arg6[%c0_18, %c0_19] : memref<1x128xf32, #tpu.memory_space<vmem>>, vector<1x128xf32>
    %26 = vector.broadcast %25 : vector<1x128xf32> to vector<16x128xf32>
    %27 = arith.addf %24, %26 : vector<16x128xf32>
    %cst_20 = arith.constant 0.000000e+00 : f32
    %28 = vector.broadcast %cst_20 : f32 to vector<16x128xf32>
    %29 = arith.maximumf %27, %28 : vector<16x128xf32>
    %c0_21 = arith.constant 0 : index
    %c0_22 = arith.constant 0 : index
    %c0_23 = arith.constant 0 : index
    %30 = vector.load %arg7[%c0_21, %c0_22, %c0_23] : memref<1x16x128xf32, #tpu.memory_space<vmem>>, vector<1x16x128xf32>
    %31 = vector.shape_cast %30 : vector<1x16x128xf32> to vector<16x128xf32>
    %32 = vector.shape_cast %29 : vector<16x128xf32> to vector<1x16x128xf32>
    tpu.vector_store %arg7[%c0_21, %c0_22, %c0_23], %32 {strides = array<i32>} : memref<1x16x128xf32, #tpu.memory_space<vmem>>, vector<1x16x128xf32>,
    return
  }
  func.func @transform_0(%arg0: i32) -> (i32, i32) {
    %c0_i32 = arith.constant 0 : i32
    %c0_i32_0 = arith.constant 0 : i32
    %c0_i32_1 = arith.constant 0 : i32
    return %c0_i32, %c0_i32_0 : i32, i32
  }
  func.func @transform_1(%arg0: i32) -> (i32, i32, i32) {
    %c0_i32 = arith.constant 0 : i32
    %c0_i32_0 = arith.constant 0 : i32
    %c0_i32_1 = arith.constant 0 : i32
    return %arg0, %c0_i32, %c0_i32_0 : i32, i32, i32
  }
  func.func @transform_2(%arg0: i32) -> (i32, i32) {
    %c0_i32 = arith.constant 0 : i32
    %c0_i32_0 = arith.constant 0 : i32
    %c0_i32_1 = arith.constant 0 : i32
    return %c0_i32, %c0_i32_0 : i32, i32
  }
  func.func @transform_3(%arg0: i32) -> (i32, i32) {
    %c0_i32 = arith.constant 0 : i32
    %c0_i32_0 = arith.constant 0 : i32
    %c0_i32_1 = arith.constant 0 : i32
    return %c0_i32, %c0_i32_0 : i32, i32
  }
  func.func @transform_4(%arg0: i32) -> (i32, i32) {
    %c0_i32 = arith.constant 0 : i32
    %c0_i32_0 = arith.constant 0 : i32
    %c0_i32_1 = arith.constant 0 : i32
    return %c0_i32, %c0_i32_0 : i32, i32
  }
  func.func @transform_5(%arg0: i32) -> (i32, i32) {
    %c0_i32 = arith.constant 0 : i32
    %c0_i32_0 = arith.constant 0 : i32
    %c0_i32_1 = arith.constant 0 : i32
    return %c0_i32, %c0_i32_0 : i32, i32
  }
  func.func @transform_6(%arg0: i32) -> (i32, i32, i32) {
    %c0_i32 = arith.constant 0 : i32
    %c0_i32_0 = arith.constant 0 : i32
    %c0_i32_1 = arith.constant 0 : i32
    return %arg0, %c0_i32, %c0_i32_0 : i32, i32, i32
  }
}

</mosaic_0001>

<llo_original>
// kernel: tpu_custom_call.1
$region0: #{tpu_custom_call.1}
  #allocation0 [shape = 'u32[]', space=smem, size = 0x4, offset = 0x4, fixed_abs, tag = 'smem constant byte address 0x4 - core index']
  #allocation1 [shape = 'u32[144,128]{1,0:T(1,128)}', space=vmem, size = 0x12000, scoped, tag = 'internal scratch']
  %s0 = inlined_call_operand.vmem [shape: f32[16,16], index: 0, kind: input, shape index: {}]
  %s1 = inlined_call_operand.vmem [shape: f32[2,16,6], index: 1, kind: input, shape index: {}]
  %s2 = inlined_call_operand.vmem [shape: f32[24,32], index: 2, kind: input, shape index: {}]
  %s3 = inlined_call_operand.vmem [shape: f32[1,32], index: 3, kind: input, shape index: {}]
  %s4 = inlined_call_operand.hbm [shape: f32[128,128], index: 4, kind: input, shape index: {}]
  %s5 = inlined_call_operand.vmem [shape: f32[1,128], index: 5, kind: input, shape index: {}]
  %s6 = inlined_call_operand.hbm [shape: f32[2,16,128], index: 6, kind: output, shape index: {}]
  %s7 = sld [smem:[#allocation0]]
  $region61: #{tpu_custom_call.1} parent=0
    _
  %s9 = ssub.s32 1, %s7
  %s10 = scalar_select 0, %s9, %s7
  $region1: #{tpu_custom_call.1} parent=0
    #allocation2 [shape = 'u8[65536]{0}', space=vmem, size = 0x10000, scoped, tag = 'input window, operand 4, single buffered']
    #allocation3 [shape = 's32[2]{0}', space=sflag, size = 0x8, scoped, tag = 'scoped memory for tpu_custom_call.1']
    #allocation4 [shape = 's32[2]{0}', space=sflag, size = 0x8, scoped, tag = 'scoped memory for tpu_custom_call.1']
    #allocation5 [shape = 'u8[16384]{0}', space=vmem, size = 0x4000, scoped, tag = 'output window, operand 0']
    %11 = vsyncpa [#allocation3], 0
    %12 = vsyncpa [#allocation4], 0
    %s13 = scalar_lea.sflag [#allocation4], 1
    %14 = vsyncpa %s13, 0
    loop: start=0, step=1, limit=4
    $region2: #{tpu_custom_call.1} parent=1 // loop_pre_header
      _
    $region3: #{tpu_custom_call.1} parent=1 // loop_header
      %s16 = sphi 0, %s20
      %p17 = scmp.ge.s32.totalorder %s16, 4
      %s24 = sphi 0, %s24
      %s26 = sphi 0, %s24
      %s27 = sphi 0, %s26
      %s41 = sphi 0, %s27
      %s47 = sphi 0, %s49
      %s50 = sphi 0, %s47
      %s51 = sphi 0, %s50
      %s67 = sphi 0, %s51
      %s71 = sphi 0, %s71
      %s73 = sphi 0, %s71
      %s74 = sphi 0, %s73
      %s88 = sphi 0, %s74
      %s92 = sphi 0, %s92
      %s94 = sphi 0, %s92
      %s95 = sphi 0, %s94
      %s109 = sphi 0, %s95
      %s113 = sphi 0, %s113
      %s115 = sphi 0, %s113
      %s116 = sphi 0, %s115
      %s130 = sphi 0, %s116
      %s134 = sphi 0, %s134
      %s136 = sphi 0, %s134
      %s137 = sphi 0, %s136
      %s151 = sphi 0, %s137
      %s157 = sphi 0, %s159
      %s160 = sphi 0, %s157
      %s161 = sphi 0, %s160
      %s177 = sphi 0, %s161
    $region4: #{tpu_custom_call.1} parent=1 // loop_header_branch
      %19 = sbr.rel (%p17) target = $region8
    $region5: #{tpu_custom_call.1} parent=1 // loop_body
      %s21 = ssub.s32 %s16, 1
      %s22 = ssub.s32 %s16, 2
      %s23 = sadd.s32 %s16, 1
      %s25 = sadd.s32 %s24, 1
      %p28 = scmp.eq.s32.totalorder %s16, 1
      %p29 = scmp.ne.s32.totalorder %s24, %s26
      %p30 = scmp.eq.s32.totalorder %s16, 0
      %p31 = por %p29, %p30
      %p32 = scmp.ne.s32.totalorder %s24, %s26
      %p33 = scmp.eq.s32.totalorder %s21, 1
      %p34 = por %p32, %p33
      %p35 = scmp.ne.s32.totalorder %s26, %s27
      %p36 = scmp.eq.s32.totalorder %s21, 0
      %p37 = por %p35, %p36
      %p38 = scmp.ne.s32.totalorder %s26, %s27
      %p39 = scmp.eq.s32.totalorder %s22, 1
      %p40 = por %p38, %p39
      %p42 = scmp.ne.s32.totalorder %s27, %s41
      %p43 = scmp.eq.s32.totalorder %s22, 0
      %p44 = por %p42, %p43
      %s45 = ssub.s32 %s16, %s23
      %p46 = scmp.eq.s32.totalorder %s45, 0
      %s48 = sadd.s32 %s47, 1
      %s49 = scalar_select %p46, %s47, %s48
      %p52 = pneg %p46
      %p53 = scmp.eq.s32.totalorder %s16, 1
      %p54 = por %p52, %p53
      %p55 = scmp.ne.s32.totalorder %s47, %s50
      %p56 = scmp.eq.s32.totalorder %s16, 0
      %p57 = por %p55, %p56
      %p58 = scmp.ne.s32.totalorder %s47, %s50
      %p59 = scmp.eq.s32.totalorder %s21, 1
      %p60 = por %p58, %p59
      %p61 = scmp.ne.s32.totalorder %s50, %s51
      %p62 = scmp.eq.s32.totalorder %s21, 0
      %p63 = por %p61, %p62
      %p64 = scmp.ne.s32.totalorder %s50, %s51
      %p65 = scmp.eq.s32.totalorder %s22, 1
      %p66 = por %p64, %p65
      %p68 = scmp.ne.s32.totalorder %s51, %s67
      %p69 = scmp.eq.s32.totalorder %s22, 0
      %p70 = por %p68, %p69
      %s72 = sadd.s32 %s71, 1
      %p75 = scmp.eq.s32.totalorder %s16, 1
      %p76 = scmp.ne.s32.totalorder %s71, %s73
      %p77 = scmp.eq.s32.totalorder %s16, 0
      %p78 = por %p76, %p77
      %p79 = scmp.ne.s32.totalorder %s71, %s73
      %p80 = scmp.eq.s32.totalorder %s21, 1
      %p81 = por %p79, %p80
      %p82 = scmp.ne.s32.totalorder %s73, %s74
      %p83 = scmp.eq.s32.totalorder %s21, 0
      %p84 = por %p82, %p83
      %p85 = scmp.ne.s32.totalorder %s73, %s74
      %p86 = scmp.eq.s32.totalorder %s22, 1
      %p87 = por %p85, %p86
      %p89 = scmp.ne.s32.totalorder %s74, %s88
      %p90 = scmp.eq.s32.totalorder %s22, 0
      %p91 = por %p89, %p90
      %s93 = sadd.s32 %s92, 1
      %p96 = scmp.eq.s32.totalorder %s16, 1
      %p97 = scmp.ne.s32.totalorder %s92, %s94
      %p98 = scmp.eq.s32.totalorder %s16, 0
      %p99 = por %p97, %p98
      %p100 = scmp.ne.s32.totalorder %s92, %s94
      %p101 = scmp.eq.s32.totalorder %s21, 1
      %p102 = por %p100, %p101
      %p103 = scmp.ne.s32.totalorder %s94, %s95
      %p104 = scmp.eq.s32.totalorder %s21, 0
      %p105 = por %p103, %p104
      %p106 = scmp.ne.s32.totalorder %s94, %s95
      %p107 = scmp.eq.s32.totalorder %s22, 1
      %p108 = por %p106, %p107
      %p110 = scmp.ne.s32.totalorder %s95, %s109
      %p111 = scmp.eq.s32.totalorder %s22, 0
      %p112 = por %p110, %p111
      %s114 = sadd.s32 %s113, 1
      %p117 = scmp.eq.s32.totalorder %s16, 1
      %p118 = scmp.ne.s32.totalorder %s113, %s115
      %p119 = scmp.eq.s32.totalorder %s16, 0
      %p120 = por %p118, %p119
      %p121 = scmp.ne.s32.totalorder %s113, %s115
      %p122 = scmp.eq.s32.totalorder %s21, 1
      %p123 = por %p121, %p122
      %p124 = scmp.ne.s32.totalorder %s115, %s116
      %p125 = scmp.eq.s32.totalorder %s21, 0
      %p126 = por %p124, %p125
      %p127 = scmp.ne.s32.totalorder %s115, %s116
      %p128 = scmp.eq.s32.totalorder %s22, 1
      %p129 = por %p127, %p128
      %p131 = scmp.ne.s32.totalorder %s116, %s130
      %p132 = scmp.eq.s32.totalorder %s22, 0
      %p133 = por %p131, %p132
      %s135 = sadd.s32 %s134, 1
      %p138 = scmp.eq.s32.totalorder %s16, 1
      %p139 = scmp.ne.s32.totalorder %s134, %s136
      %p140 = scmp.eq.s32.totalorder %s16, 0
      %p141 = por %p139, %p140
      %p142 = scmp.ne.s32.totalorder %s134, %s136
      %p143 = scmp.eq.s32.totalorder %s21, 1
      %p144 = por %p142, %p143
      %p145 = scmp.ne.s32.totalorder %s136, %s137
      %p146 = scmp.eq.s32.totalorder %s21, 0
      %p147 = por %p145, %p146
      %p148 = scmp.ne.s32.totalorder %s136, %s137
      %p149 = scmp.eq.s32.totalorder %s22, 1
      %p150 = por %p148, %p149
      %p152 = scmp.ne.s32.totalorder %s137, %s151
      %p153 = scmp.eq.s32.totalorder %s22, 0
      %p154 = por %p152, %p153
      %s155 = ssub.s32 %s16, %s23
      %p156 = scmp.eq.s32.totalorder %s155, 0
      %s158 = sadd.s32 %s157, 1
      %s159 = scalar_select %p156, %s157, %s158
      %p162 = pneg %p156
      %p163 = scmp.eq.s32.totalorder %s16, 1
      %p164 = por %p162, %p163
      %p165 = scmp.ne.s32.totalorder %s157, %s160
      %p166 = scmp.eq.s32.totalorder %s16, 0
      %p167 = por %p165, %p166
      %p168 = scmp.ne.s32.totalorder %s157, %s160
      %p169 = scmp.eq.s32.totalorder %s21, 1
      %p170 = por %p168, %p169
      %p171 = scmp.ne.s32.totalorder %s160, %s161
      %p172 = scmp.eq.s32.totalorder %s21, 0
      %p173 = por %p171, %p172
      %p174 = scmp.ne.s32.totalorder %s160, %s161
      %p175 = scmp.eq.s32.totalorder %s22, 1
      %p176 = por %p174, %p175
      %p178 = scmp.ne.s32.totalorder %s161, %s177
      %p179 = scmp.eq.s32.totalorder %s22, 0
      %p180 = por %p178, %p179
      %p181 = scmp.le.s32.totalorder 1, %s16
      %p182 = scmp.lt.s32.totalorder %s16, 3
      %p183 = pnand %p181, %p182
      %p184 = pneg %p183
      // Predicated region
      $region9: #{tpu_custom_call.1} parent=5 // pred_check
        _
      $region10: #{tpu_custom_call.1} parent=5 // pred_check_branch
        %186 = sbr.rel (%p183) target = $region12
      $region11: #{tpu_custom_call.1} parent=5 // pred_region
        %s187 = ssub.s32 %s16, 1
        // Predicated region
        $region13: #{tpu_custom_call.1} parent=11 // pred_check
          %p188 = pneg %p37
        $region14: #{tpu_custom_call.1} parent=11 // pred_check_branch
          %190 = sbr.rel (%p188) target = $region16
        $region15: #{tpu_custom_call.1} parent=11 // pred_region
          _
        $region16: #{tpu_custom_call.1} parent=11 // pred_fallthru
          _
        // Predicated region
        $region17: #{tpu_custom_call.1} parent=11 // pred_check
          %p191 = pneg %p84
        $region18: #{tpu_custom_call.1} parent=11 // pred_check_branch
          %193 = sbr.rel (%p191) target = $region20
        $region19: #{tpu_custom_call.1} parent=11 // pred_region
          _
        $region20: #{tpu_custom_call.1} parent=11 // pred_fallthru
          _
        // Predicated region
        $region21: #{tpu_custom_call.1} parent=11 // pred_check
          %p194 = pneg %p105
        $region22: #{tpu_custom_call.1} parent=11 // pred_check_branch
          %196 = sbr.rel (%p194) target = $region24
        $region23: #{tpu_custom_call.1} parent=11 // pred_region
          _
        $region24: #{tpu_custom_call.1} parent=11 // pred_fallthru
          _
        // Predicated region
        $region25: #{tpu_custom_call.1} parent=11 // pred_check
          %p197 = pneg %p126
        $region26: #{tpu_custom_call.1} parent=11 // pred_check_branch
          %199 = sbr.rel (%p197) target = $region28
        $region27: #{tpu_custom_call.1} parent=11 // pred_region
          %s201 = ssub.s32 2048, 2048
          %202 = vsyncadd [#allocation3], %s201
          %s203 = sshll.u32 [#allocation2], 4
          %s204 = int_to_ptr.vmem [resolvable:$true] %s203
          %209 = dma.hbm_to_vmem [thread:$0]  %s4, 2048, %s204, [#allocation3], 128, 128, 8
        $region28: #{tpu_custom_call.1} parent=11 // pred_fallthru
          _
        // Predicated region
        $region29: #{tpu_custom_call.1} parent=11 // pred_check
          %p210 = pneg %p147
        $region30: #{tpu_custom_call.1} parent=11 // pred_check_branch
          %212 = sbr.rel (%p210) target = $region32
        $region31: #{tpu_custom_call.1} parent=11 // pred_region
          _
        $region32: #{tpu_custom_call.1} parent=11 // pred_fallthru
          _
      $region12: #{tpu_custom_call.1} parent=5 // pred_fallthru
        _
      %p213 = scmp.lt.s32.totalorder %s16, 2
      // Predicated region
      $region33: #{tpu_custom_call.1} parent=5 // pred_check
        %p214 = pneg %p213
      $region34: #{tpu_custom_call.1} parent=5 // pred_check_branch
        %216 = sbr.rel (%p214) target = $region36
      $region35: #{tpu_custom_call.1} parent=5 // pred_region
        // Predicated region
        $region37: #{tpu_custom_call.1} parent=35 // pred_check
          %p217 = pneg %p57
        $region38: #{tpu_custom_call.1} parent=35 // pred_check_branch
          %219 = sbr.rel (%p217) target = $region40
        $region39: #{tpu_custom_call.1} parent=35 // pred_region
          %p220 = scmp.lt.s32.totalorder %s16, 1
          %s221 = scalar_select %p220, %s16, 1
          %s222 = smul.addr %s221, 2
          %s223 = smul.addr %s222, 8
          %s224 = scalar_lea.vmem %s1, %s223
        $region40: #{tpu_custom_call.1} parent=35 // pred_fallthru
          _
      $region36: #{tpu_custom_call.1} parent=5 // pred_fallthru
        _
      %p225 = scmp.le.s32.totalorder 1, %s16
      %p226 = scmp.lt.s32.totalorder %s16, 3
      %p227 = pnand %p225, %p226
      %p228 = pneg %p227
      // Predicated region
      $region41: #{tpu_custom_call.1} parent=5 // pred_check
        _
      $region42: #{tpu_custom_call.1} parent=5 // pred_check_branch
        %230 = sbr.rel (%p227) target = $region44
      $region43: #{tpu_custom_call.1} parent=5 // pred_region
        %s231 = ssub.s32 %s16, 1
        // Predicated region
        $region45: #{tpu_custom_call.1} parent=43 // pred_check
          %p232 = pneg %p126
        $region46: #{tpu_custom_call.1} parent=43 // pred_check_branch
          %234 = sbr.rel (%p232) target = $region48
        $region47: #{tpu_custom_call.1} parent=43 // pred_region
          %235 = dma.done [#allocation3], 2048
        $region48: #{tpu_custom_call.1} parent=43 // pred_fallthru
          _
        %p236 = pneg %p37
        %p237 = pneg %p34
        %p238 = scmp.lt.s32.totalorder %s21, 1
        %s239 = scalar_select %p238, %s21, 1
        %s240 = smul.addr %s239, 2
        %s241 = smul.addr %s240, 8
        %s242 = scalar_lea.vmem %s1, %s241
        %p243 = pneg %p63
        %p244 = pneg %p60
        %p245 = pneg %p84
        %p246 = pneg %p81
        %p247 = pneg %p105
        %p248 = pneg %p102
        %p249 = pneg %p126
        %p250 = pneg %p123
        %p251 = pneg %p147
        %p252 = pneg %p144
        %p253 = pneg %p173
        %p254 = pneg %p170
        %s255 = sand.u32 %s160, 1
        %s256 = scalar_lea.sflag [#allocation4], %s255
        %s257 = sand.u32 %s160, 1
        %s258 = smul.addr %s257, 16
        %s259 = scalar_lea.vmem [#allocation5], %s258
        %p260 = scmp.lt.s32.totalorder %s21, 1
        %s261 = scalar_select %p260, %s21, 1
        %s262 = smul.addr %s261, 2
        %s263 = smul.addr %s262, 8
        %s264 = scalar_lea.vmem %s1, %s263
        %v265 = vld [vmem:[%s0] sm:$0xff]
        %v266 = vld [vmem:[%s0 + $0x8] sm:$0xff]
        %v267 = vadd.f32 %v265, %v265
        %v268 = vadd.f32 %v266, %v266
        %v269 = vld [vmem:[%s264] sm:$0xff]
        %v270 = vld [vmem:[%s264 + $0x8] sm:$0xff]
        %vm271 = vcmask 130048
        %v273 = vsel %vm271, %v265, 0
        %v276 = vsel %vm271, %v266, 0
        %278 = vmatprep.subr.mxu0 0.0
        %279 = vmatpush1.msra.mxu0 %v269
        %280 = vmatprep.subr.mxu0 0.0
        %281 = vmatpush1.msra.mxu0 %v270
        %282 = vmatprep.subr.mxu0 0.0
        %283 = vmatpush1.msra.mxu0 0.0
        %284 = vmatprep.subr.mxu0 0.0
        %285 = vmatpush1.msra.mxu0 0.0
        %286 = vmatprep.subr.mxu0 0.0
        %287 = vmatpush1.msra.mxu0 0.0
        %288 = vmatprep.subr.mxu0 0.0
        %289 = vmatpush1.msra.mxu0 0.0
        %290 = vmatprep.subr.mxu0 0.0
        %291 = vmatpush1.msra.mxu0 0.0
        %292 = vmatprep.subr.mxu0 0.0
        %293 = vmatpush1.msra.mxu0 0.0
        %294 = vmatprep.subr.mxu0 0.0
        %295 = vmatpush1.msra.mxu0 0.0
        %296 = vmatprep.subr.mxu0 0.0
        %297 = vmatpush1.msra.mxu0 0.0
        %298 = vmatprep.subr.mxu0 0.0
        %299 = vmatpush1.msra.mxu0 0.0
        %300 = vmatprep.subr.mxu0 0.0
        %301 = vmatpush1.msra.mxu0 0.0
        %302 = vmatprep.subr.mxu0 0.0
        %303 = vmatpush1.msra.mxu0 0.0
        %304 = vmatprep.subr.mxu0 0.0
        %305 = vmatpush1.msra.mxu0 0.0
        %306 = vmatprep.subr.mxu0 0.0
        %307 = vmatpush1.msra.mxu0 0.0
        %308 = vmatprep.subr.mxu0 0.0
        %309 = vmatpush1.msra.mxu0 0.0
        %310 = vmatprep.subr.mxu0 0.0
        %311 = vmatpush1.msra.mxu0 0.0
        %312 = vmatprep.subr.mxu0 0.0
        %313 = vmatpush1.msra.mxu0 0.0
        %314 = vmatprep.subr.mxu0 0.0
        %315 = vmatpush1.msra.mxu0 0.0
        %316 = vmatprep.subr.mxu0 0.0
        %317 = vmatpush1.msra.mxu0 0.0
        %318 = vmatprep.subr.mxu0 0.0
        %319 = vmatpush1.msra.mxu0 0.0
        %320 = vmatprep.subr.mxu0 0.0
        %321 = vmatpush1.msra.mxu0 0.0
        %322 = vmatprep.subr.mxu0 0.0
        %323 = vmatpush1.msra.mxu0 0.0
        %324 = vmatprep.subr.mxu0 0.0
        %325 = vmatpush1.msra.mxu0 0.0
        %326 = vmatprep.subr.mxu0 0.0
        %327 = vmatpush1.msra.mxu0 0.0
        %328 = vmatprep.subr.mxu0 0.0
        %329 = vmatpush1.msra.mxu0 0.0
        %330 = vmatprep.subr.mxu0 0.0
        %331 = vmatpush1.msra.mxu0 0.0
        %332 = vmatprep.subr.mxu0 0.0
        %333 = vmatpush1.msra.mxu0 0.0
        %334 = vmatprep.subr.mxu0 0.0
        %335 = vmatpush1.msra.mxu0 0.0
        %336 = vmatprep.subr.mxu0 0.0
        %337 = vmatpush1.msra.mxu0 0.0
        %338 = vmatprep.subr.mxu0 0.0
        %339 = vmatpush1.msra.mxu0 0.0
        %340 = vmatprep.subr.mxu0 0.0
        %341 = vmatpush1.msra.mxu0 0.0
        %342 = vmatprep.mubr.f32.mxu0 0.0
        %343 = vmatmul.mubr.f32.gmra.mrb[0].mxu0 %v273
        %v344 = vpop.f32.mrb[0].mxu0
        %v345 = vadd.f32 0.0, %v344
        %v346 = vpop.f32.mrb[0].mxu0
        %347 = vmatprep.mubr.f32.mxu0 0.0
        %348 = vmatmul.mubr.f32.gmra.mrb[0].mxu0 %v276
        %v349 = vpop.f32.mrb[0].mxu0
        %v350 = vadd.f32 0.0, %v349
        %v351 = vpop.f32.mrb[0].mxu0
        %352 = vdwg.mxu0
        %v354 = vsel %vm271, %v267, 0
        %v357 = vsel %vm271, %v268, 0
        %359 = vmatprep.subr.mxu0 0.0
        %360 = vmatpush1.msra.mxu0 %v345
        %361 = vmatprep.subr.mxu0 0.0
        %362 = vmatpush1.msra.mxu0 %v350
        %363 = vmatprep.subr.mxu0 0.0
        %364 = vmatpush1.msra.mxu0 0.0
        %365 = vmatprep.subr.mxu0 0.0
        %366 = vmatpush1.msra.mxu0 0.0
        %367 = vmatprep.subr.mxu0 0.0
        %368 = vmatpush1.msra.mxu0 0.0
        %369 = vmatprep.subr.mxu0 0.0
        %370 = vmatpush1.msra.mxu0 0.0
        %371 = vmatprep.subr.mxu0 0.0
        %372 = vmatpush1.msra.mxu0 0.0
        %373 = vmatprep.subr.mxu0 0.0
        %374 = vmatpush1.msra.mxu0 0.0
        %375 = vmatprep.subr.mxu0 0.0
        %376 = vmatpush1.msra.mxu0 0.0
        %377 = vmatprep.subr.mxu0 0.0
        %378 = vmatpush1.msra.mxu0 0.0
        %379 = vmatprep.subr.mxu0 0.0
        %380 = vmatpush1.msra.mxu0 0.0
        %381 = vmatprep.subr.mxu0 0.0
        %382 = vmatpush1.msra.mxu0 0.0
        %383 = vmatprep.subr.mxu0 0.0
        %384 = vmatpush1.msra.mxu0 0.0
        %385 = vmatprep.subr.mxu0 0.0
        %386 = vmatpush1.msra.mxu0 0.0
        %387 = vmatprep.subr.mxu0 0.0
        %388 = vmatpush1.msra.mxu0 0.0
        %389 = vmatprep.subr.mxu0 0.0
        %390 = vmatpush1.msra.mxu0 0.0
        %391 = vmatprep.subr.mxu0 0.0
        %392 = vmatpush1.msra.mxu0 0.0
        %393 = vmatprep.subr.mxu0 0.0
        %394 = vmatpush1.msra.mxu0 0.0
        %395 = vmatprep.subr.mxu0 0.0
        %396 = vmatpush1.msra.mxu0 0.0
        %397 = vmatprep.subr.mxu0 0.0
        %398 = vmatpush1.msra.mxu0 0.0
        %399 = vmatprep.subr.mxu0 0.0
        %400 = vmatpush1.msra.mxu0 0.0
        %401 = vmatprep.subr.mxu0 0.0
        %402 = vmatpush1.msra.mxu0 0.0
        %403 = vmatprep.subr.mxu0 0.0
        %404 = vmatpush1.msra.mxu0 0.0
        %405 = vmatprep.subr.mxu0 0.0
        %406 = vmatpush1.msra.mxu0 0.0
        %407 = vmatprep.subr.mxu0 0.0
        %408 = vmatpush1.msra.mxu0 0.0
        %409 = vmatprep.subr.mxu0 0.0
        %410 = vmatpush1.msra.mxu0 0.0
        %411 = vmatprep.subr.mxu0 0.0
        %412 = vmatpush1.msra.mxu0 0.0
        %413 = vmatprep.subr.mxu0 0.0
        %414 = vmatpush1.msra.mxu0 0.0
        %415 = vmatprep.subr.mxu0 0.0
        %416 = vmatpush1.msra.mxu0 0.0
        %417 = vmatprep.subr.mxu0 0.0
        %418 = vmatpush1.msra.mxu0 0.0
        %419 = vmatprep.subr.mxu0 0.0
        %420 = vmatpush1.msra.mxu0 0.0
        %421 = vmatprep.subr.mxu0 0.0
        %422 = vmatpush1.msra.mxu0 0.0
        %423 = vmatprep.mubr.f32.mxu0 0.0
        %424 = vmatmul.mubr.f32.gmra.mrb[0].mxu0 %v354
        %v425 = vpop.f32.mrb[0].mxu0
        %v426 = vadd.f32 0.0, %v425
        %v427 = vpop.f32.mrb[0].mxu0
        %428 = vmatprep.mubr.f32.mxu0 0.0
        %429 = vmatmul.mubr.f32.gmra.mrb[0].mxu0 %v357
        %v430 = vpop.f32.mrb[0].mxu0
        %v431 = vadd.f32 0.0, %v430
        %v432 = vpop.f32.mrb[0].mxu0
        %433 = vdwg.mxu0
        %v434 = vsub.f32 %v426, %v269
        %v435 = vsub.f32 %v431, %v270
        %436 = vmatprep.subr.mxu0 0.0
        %437 = vmatpush1.msra.mxu0 %v434
        %438 = vmatprep.subr.mxu0 0.0
        %439 = vmatpush1.msra.mxu0 %v435
        %440 = vmatprep.subr.mxu0 0.0
        %441 = vmatpush1.msra.mxu0 0.0
        %442 = vmatprep.subr.mxu0 0.0
        %443 = vmatpush1.msra.mxu0 0.0
        %444 = vmatprep.subr.mxu0 0.0
        %445 = vmatpush1.msra.mxu0 0.0
        %446 = vmatprep.subr.mxu0 0.0
        %447 = vmatpush1.msra.mxu0 0.0
        %448 = vmatprep.subr.mxu0 0.0
        %449 = vmatpush1.msra.mxu0 0.0
        %450 = vmatprep.subr.mxu0 0.0
        %451 = vmatpush1.msra.mxu0 0.0
        %452 = vmatprep.subr.mxu0 0.0
        %453 = vmatpush1.msra.mxu0 0.0
        %454 = vmatprep.subr.mxu0 0.0
        %455 = vmatpush1.msra.mxu0 0.0
        %456 = vmatprep.subr.mxu0 0.0
        %457 = vmatpush1.msra.mxu0 0.0
        %458 = vmatprep.subr.mxu0 0.0
        %459 = vmatpush1.msra.mxu0 0.0
        %460 = vmatprep.subr.mxu0 0.0
        %461 = vmatpush1.msra.mxu0 0.0
        %462 = vmatprep.subr.mxu0 0.0
        %463 = vmatpush1.msra.mxu0 0.0
        %464 = vmatprep.subr.mxu0 0.0
        %465 = vmatpush1.msra.mxu0 0.0
        %466 = vmatprep.subr.mxu0 0.0
        %467 = vmatpush1.msra.mxu0 0.0
        %468 = vmatprep.subr.mxu0 0.0
        %469 = vmatpush1.msra.mxu0 0.0
        %470 = vmatprep.subr.mxu0 0.0
        %471 = vmatpush1.msra.mxu0 0.0
        %472 = vmatprep.subr.mxu0 0.0
        %473 = vmatpush1.msra.mxu0 0.0
        %474 = vmatprep.subr.mxu0 0.0
        %475 = vmatpush1.msra.mxu0 0.0
        %476 = vmatprep.subr.mxu0 0.0
        %477 = vmatpush1.msra.mxu0 0.0
        %478 = vmatprep.subr.mxu0 0.0
        %479 = vmatpush1.msra.mxu0 0.0
        %480 = vmatprep.subr.mxu0 0.0
        %481 = vmatpush1.msra.mxu0 0.0
        %482 = vmatprep.subr.mxu0 0.0
        %483 = vmatpush1.msra.mxu0 0.0
        %484 = vmatprep.subr.mxu0 0.0
        %485 = vmatpush1.msra.mxu0 0.0
        %486 = vmatprep.subr.mxu0 0.0
        %487 = vmatpush1.msra.mxu0 0.0
        %488 = vmatprep.subr.mxu0 0.0
        %489 = vmatpush1.msra.mxu0 0.0
        %490 = vmatprep.subr.mxu0 0.0
        %491 = vmatpush1.msra.mxu0 0.0
        %492 = vmatprep.subr.mxu0 0.0
        %493 = vmatpush1.msra.mxu0 0.0
        %494 = vmatprep.subr.mxu0 0.0
        %495 = vmatpush1.msra.mxu0 0.0
        %496 = vmatprep.subr.mxu0 0.0
        %497 = vmatpush1.msra.mxu0 0.0
        %498 = vmatprep.subr.mxu0 0.0
        %499 = vmatpush1.msra.mxu0 0.0
        %500 = vmatprep.mubr.f32.mxu0 0.0
        %501 = vmatmul.mubr.f32.gmra.mrb[0].mxu0 %v354
        %v502 = vpop.f32.mrb[0].mxu0
        %v503 = vadd.f32 0.0, %v502
        %v504 = vpop.f32.mrb[0].mxu0
        %505 = vmatprep.mubr.f32.mxu0 0.0
        %506 = vmatmul.mubr.f32.gmra.mrb[0].mxu0 %v357
        %v507 = vpop.f32.mrb[0].mxu0
        %v508 = vadd.f32 0.0, %v507
        %v509 = vpop.f32.mrb[0].mxu0
        %510 = vdwg.mxu0
        %v511 = vsub.f32 %v503, %v345
        %v512 = vsub.f32 %v508, %v350
        %515 = vrot.lane.b32.xlu0 %v345, 6
        %v516 = vpop.permute.xlu0 %515
        %517 = vrot.lane.b32.xlu0 %v350, 6
        %v518 = vpop.permute.xlu0 %517
        %523 = vrot.lane.b32.xlu0 %v434, 12
        %v524 = vpop.permute.xlu0 %523
        %525 = vrot.lane.b32.xlu0 %v435, 12
        %v526 = vpop.permute.xlu0 %525
        %531 = vrot.lane.b32.xlu0 %v511, 18
        %v532 = vpop.permute.xlu0 %531
        %533 = vrot.lane.b32.xlu0 %v512, 18
        %v534 = vpop.permute.xlu0 %533
        %vm537 = vcmask 48128
        %v538 = vsel %vm537, %v269, %v516
        %v539 = vsel %vm537, %v270, %v518
        %vm540 = vcmask 97280
        %v541 = vsel %vm540, %v538, %v524
        %v542 = vsel %vm540, %v539, %v526
        %vm543 = vcmask 146432
        %v544 = vsel %vm543, %v541, %v532
        %v545 = vsel %vm543, %v542, %v534
        %v546 = vld [vmem:[%s2] sm:$0xff]
        %v547 = vld [vmem:[%s2 + $0x8] sm:$0xff]
        %v548 = vld [vmem:[%s2 + $0x10] sm:$0xff]
        %v549 = vld [vmem:[%s3] sm:$0x1]
        %v551 = vlaneseq
        %v552 = vshrl.u32 %v551, 7
        %v553 = vsub.s32 0, %v552
        %v554 = vrot.slane %v549, %v553
        %vm556 = vcmask 195584
        %v558 = vsel %vm556, %v544, 0
        %v561 = vsel %vm556, %v545, 0
        %563 = vmatprep.subr.mxu0 0.0
        %564 = vmatpush1.msra.mxu0 %v546
        %565 = vmatprep.subr.mxu0 0.0
        %566 = vmatpush1.msra.mxu0 %v547
        %567 = vmatprep.subr.mxu0 0.0
        %568 = vmatpush1.msra.mxu0 %v548
        %569 = vmatprep.subr.mxu0 0.0
        %570 = vmatpush1.msra.mxu0 0.0
        %571 = vmatprep.subr.mxu0 0.0
        %572 = vmatpush1.msra.mxu0 0.0
        %573 = vmatprep.subr.mxu0 0.0
        %574 = vmatpush1.msra.mxu0 0.0
        %575 = vmatprep.subr.mxu0 0.0
        %576 = vmatpush1.msra.mxu0 0.0
        %577 = vmatprep.subr.mxu0 0.0
        %578 = vmatpush1.msra.mxu0 0.0
        %579 = vmatprep.subr.mxu0 0.0
        %580 = vmatpush1.msra.mxu0 0.0
        %581 = vmatprep.subr.mxu0 0.0
        %582 = vmatpush1.msra.mxu0 0.0
        %583 = vmatprep.subr.mxu0 0.0
        %584 = vmatpush1.msra.mxu0 0.0
        %585 = vmatprep.subr.mxu0 0.0
        %586 = vmatpush1.msra.mxu0 0.0
        %587 = vmatprep.subr.mxu0 0.0
        %588 = vmatpush1.msra.mxu0 0.0
        %589 = vmatprep.subr.mxu0 0.0
        %590 = vmatpush1.msra.mxu0 0.0
        %591 = vmatprep.subr.mxu0 0.0
        %592 = vmatpush1.msra.mxu0 0.0
        %593 = vmatprep.subr.mxu0 0.0
        %594 = vmatpush1.msra.mxu0 0.0
        %595 = vmatprep.subr.mxu0 0.0
        %596 = vmatpush1.msra.mxu0 0.0
        %597 = vmatprep.subr.mxu0 0.0
        %598 = vmatpush1.msra.mxu0 0.0
        %599 = vmatprep.subr.mxu0 0.0
        %600 = vmatpush1.msra.mxu0 0.0
        %601 = vmatprep.subr.mxu0 0.0
        %602 = vmatpush1.msra.mxu0 0.0
        %603 = vmatprep.subr.mxu0 0.0
        %604 = vmatpush1.msra.mxu0 0.0
        %605 = vmatprep.subr.mxu0 0.0
        %606 = vmatpush1.msra.mxu0 0.0
        %607 = vmatprep.subr.mxu0 0.0
        %608 = vmatpush1.msra.mxu0 0.0
        %609 = vmatprep.subr.mxu0 0.0
        %610 = vmatpush1.msra.mxu0 0.0
        %611 = vmatprep.subr.mxu0 0.0
        %612 = vmatpush1.msra.mxu0 0.0
        %613 = vmatprep.subr.mxu0 0.0
        %614 = vmatpush1.msra.mxu0 0.0
        %615 = vmatprep.subr.mxu0 0.0
        %616 = vmatpush1.msra.mxu0 0.0
        %617 = vmatprep.subr.mxu0 0.0
        %618 = vmatpush1.msra.mxu0 0.0
        %619 = vmatprep.subr.mxu0 0.0
        %620 = vmatpush1.msra.mxu0 0.0
        %621 = vmatprep.subr.mxu0 0.0
        %622 = vmatpush1.msra.mxu0 0.0
        %623 = vmatprep.subr.mxu0 0.0
        %624 = vmatpush1.msra.mxu0 0.0
        %625 = vmatprep.subr.mxu0 0.0
        %626 = vmatpush1.msra.mxu0 0.0
        %627 = vmatprep.mubr.f32.mxu0 0.0
        %628 = vmatmul.mubr.f32.gmra.mrb[0].mxu0 %v558
        %v629 = vpop.f32.mrb[0].mxu0
        %v630 = vadd.f32 %v554, %v629
        %v631 = vpop.f32.mrb[0].mxu0
        %632 = vmatprep.mubr.f32.mxu0 0.0
        %633 = vmatmul.mubr.f32.gmra.mrb[0].mxu0 %v561
        %v634 = vpop.f32.mrb[0].mxu0
        %v635 = vadd.f32 %v554, %v634
        %v636 = vpop.f32.mrb[0].mxu0
        %637 = vdwg.mxu0
        %v638 = vmax.f32 %v630, 0.0
        %v639 = vmax.f32 %v635, 0.0
        %640 = vmatprep.subr.mxu0 0.0
        %641 = vmatpush1.msra.mxu0 %v638
        %642 = vmatprep.subr.mxu0 0.0
        %643 = vmatpush1.msra.mxu0 %v639
        %644 = vmatprep.subr.mxu0 0.0
        %645 = vmatpush1.msra.mxu0 0.0
        %646 = vmatprep.subr.mxu0 0.0
        %647 = vmatpush1.msra.mxu0 0.0
        %648 = vmatprep.subr.mxu0 0.0
        %649 = vmatpush1.msra.mxu0 0.0
        %650 = vmatprep.subr.mxu0 0.0
        %651 = vmatpush1.msra.mxu0 0.0
        %652 = vmatprep.subr.mxu0 0.0
        %653 = vmatpush1.msra.mxu0 0.0
        %654 = vmatprep.subr.mxu0 0.0
        %655 = vmatpush1.msra.mxu0 0.0
        %656 = vmatprep.subr.mxu0 0.0
        %657 = vmatpush1.msra.mxu0 0.0
        %658 = vmatprep.subr.mxu0 0.0
        %659 = vmatpush1.msra.mxu0 0.0
        %660 = vmatprep.subr.mxu0 0.0
        %661 = vmatpush1.msra.mxu0 0.0
        %662 = vmatprep.subr.mxu0 0.0
        %663 = vmatpush1.msra.mxu0 0.0
        %664 = vmatprep.subr.mxu0 0.0
        %665 = vmatpush1.msra.mxu0 0.0
        %666 = vmatprep.subr.mxu0 0.0
        %667 = vmatpush1.msra.mxu0 0.0
        %668 = vmatprep.subr.mxu0 0.0
        %669 = vmatpush1.msra.mxu0 0.0
        %670 = vmatprep.subr.mxu0 0.0
        %671 = vmatpush1.msra.mxu0 0.0
        %672 = vmatprep.subr.mxu0 0.0
        %673 = vmatpush1.msra.mxu0 0.0
        %674 = vmatprep.subr.mxu0 0.0
        %675 = vmatpush1.msra.mxu0 0.0
        %676 = vmatprep.subr.mxu0 0.0
        %677 = vmatpush1.msra.mxu0 0.0
        %678 = vmatprep.subr.mxu0 0.0
        %679 = vmatpush1.msra.mxu0 0.0
        %680 = vmatprep.subr.mxu0 0.0
        %681 = vmatpush1.msra.mxu0 0.0
        %682 = vmatprep.subr.mxu0 0.0
        %683 = vmatpush1.msra.mxu0 0.0
        %684 = vmatprep.subr.mxu0 0.0
        %685 = vmatpush1.msra.mxu0 0.0
        %686 = vmatprep.subr.mxu0 0.0
        %687 = vmatpush1.msra.mxu0 0.0
        %688 = vmatprep.subr.mxu0 0.0
        %689 = vmatpush1.msra.mxu0 0.0
        %690 = vmatprep.subr.mxu0 0.0
        %691 = vmatpush1.msra.mxu0 0.0
        %692 = vmatprep.subr.mxu0 0.0
        %693 = vmatpush1.msra.mxu0 0.0
        %694 = vmatprep.subr.mxu0 0.0
        %695 = vmatpush1.msra.mxu0 0.0
        %696 = vmatprep.subr.mxu0 0.0
        %697 = vmatpush1.msra.mxu0 0.0
        %698 = vmatprep.subr.mxu0 0.0
        %699 = vmatpush1.msra.mxu0 0.0
        %700 = vmatprep.subr.mxu0 0.0
        %701 = vmatpush1.msra.mxu0 0.0
        %702 = vmatprep.subr.mxu0 0.0
        %703 = vmatpush1.msra.mxu0 0.0
        %704 = vmatprep.mubr.f32.mxu0 0.0
        %705 = vmatmul.mubr.f32.gmra.mrb[0].mxu0 %v273
        %v706 = vpop.f32.mrb[0].mxu0
        %v707 = vadd.f32 0.0, %v706
        %v708 = vpop.f32.mrb[0].mxu0
        %709 = vmatprep.mubr.f32.mxu0 0.0
        %710 = vmatmul.mubr.f32.gmra.mrb[0].mxu0 %v276
        %v711 = vpop.f32.mrb[0].mxu0
        %v712 = vadd.f32 0.0, %v711
        %v713 = vpop.f32.mrb[0].mxu0
        %714 = vdwg.mxu0
        %715 = vmatprep.subr.mxu0 0.0
        %716 = vmatpush1.msra.mxu0 %v707
        %717 = vmatprep.subr.mxu0 0.0
        %718 = vmatpush1.msra.mxu0 %v712
        %719 = vmatprep.subr.mxu0 0.0
        %720 = vmatpush1.msra.mxu0 0.0
        %721 = vmatprep.subr.mxu0 0.0
        %722 = vmatpush1.msra.mxu0 0.0
        %723 = vmatprep.subr.mxu0 0.0
        %724 = vmatpush1.msra.mxu0 0.0
        %725 = vmatprep.subr.mxu0 0.0
        %726 = vmatpush1.msra.mxu0 0.0
        %727 = vmatprep.subr.mxu0 0.0
        %728 = vmatpush1.msra.mxu0 0.0
        %729 = vmatprep.subr.mxu0 0.0
        %730 = vmatpush1.msra.mxu0 0.0
        %731 = vmatprep.subr.mxu0 0.0
        %732 = vmatpush1.msra.mxu0 0.0
        %733 = vmatprep.subr.mxu0 0.0
        %734 = vmatpush1.msra.mxu0 0.0
        %735 = vmatprep.subr.mxu0 0.0
        %736 = vmatpush1.msra.mxu0 0.0
        %737 = vmatprep.subr.mxu0 0.0
        %738 = vmatpush1.msra.mxu0 0.0
        %739 = vmatprep.subr.mxu0 0.0
        %740 = vmatpush1.msra.mxu0 0.0
        %741 = vmatprep.subr.mxu0 0.0
        %742 = vmatpush1.msra.mxu0 0.0
        %743 = vmatprep.subr.mxu0 0.0
        %744 = vmatpush1.msra.mxu0 0.0
        %745 = vmatprep.subr.mxu0 0.0
        %746 = vmatpush1.msra.mxu0 0.0
        %747 = vmatprep.subr.mxu0 0.0
        %748 = vmatpush1.msra.mxu0 0.0
        %749 = vmatprep.subr.mxu0 0.0
        %750 = vmatpush1.msra.mxu0 0.0
        %751 = vmatprep.subr.mxu0 0.0
        %752 = vmatpush1.msra.mxu0 0.0
        %753 = vmatprep.subr.mxu0 0.0
        %754 = vmatpush1.msra.mxu0 0.0
        %755 = vmatprep.subr.mxu0 0.0
        %756 = vmatpush1.msra.mxu0 0.0
        %757 = vmatprep.subr.mxu0 0.0
        %758 = vmatpush1.msra.mxu0 0.0
        %759 = vmatprep.subr.mxu0 0.0
        %760 = vmatpush1.msra.mxu0 0.0
        %761 = vmatprep.subr.mxu0 0.0
        %762 = vmatpush1.msra.mxu0 0.0
        %763 = vmatprep.subr.mxu0 0.0
        %764 = vmatpush1.msra.mxu0 0.0
        %765 = vmatprep.subr.mxu0 0.0
        %766 = vmatpush1.msra.mxu0 0.0
        %767 = vmatprep.subr.mxu0 0.0
        %768 = vmatpush1.msra.mxu0 0.0
        %769 = vmatprep.subr.mxu0 0.0
        %770 = vmatpush1.msra.mxu0 0.0
        %771 = vmatprep.subr.mxu0 0.0
        %772 = vmatpush1.msra.mxu0 0.0
        %773 = vmatprep.subr.mxu0 0.0
        %774 = vmatpush1.msra.mxu0 0.0
        %775 = vmatprep.subr.mxu0 0.0
        %776 = vmatpush1.msra.mxu0 0.0
        %777 = vmatprep.subr.mxu0 0.0
        %778 = vmatpush1.msra.mxu0 0.0
        %779 = vmatprep.mubr.f32.mxu0 0.0
        %780 = vmatmul.mubr.f32.gmra.mrb[0].mxu0 %v354
        %v781 = vpop.f32.mrb[0].mxu0
        %v782 = vadd.f32 0.0, %v781
        %v783 = vpop.f32.mrb[0].mxu0
        %784 = vmatprep.mubr.f32.mxu0 0.0
        %785 = vmatmul.mubr.f32.gmra.mrb[0].mxu0 %v357
        %v786 = vpop.f32.mrb[0].mxu0
        %v787 = vadd.f32 0.0, %v786
        %v788 = vpop.f32.mrb[0].mxu0
        %789 = vdwg.mxu0
        %v790 = vsub.f32 %v782, %v638
        %v791 = vsub.f32 %v787, %v639
        %792 = vmatprep.subr.mxu0 0.0
        %793 = vmatpush1.msra.mxu0 %v790
        %794 = vmatprep.subr.mxu0 0.0
        %795 = vmatpush1.msra.mxu0 %v791
        %796 = vmatprep.subr.mxu0 0.0
        %797 = vmatpush1.msra.mxu0 0.0
        %798 = vmatprep.subr.mxu0 0.0
        %799 = vmatpush1.msra.mxu0 0.0
        %800 = vmatprep.subr.mxu0 0.0
        %801 = vmatpush1.msra.mxu0 0.0
        %802 = vmatprep.subr.mxu0 0.0
        %803 = vmatpush1.msra.mxu0 0.0
        %804 = vmatprep.subr.mxu0 0.0
        %805 = vmatpush1.msra.mxu0 0.0
        %806 = vmatprep.subr.mxu0 0.0
        %807 = vmatpush1.msra.mxu0 0.0
        %808 = vmatprep.subr.mxu0 0.0
        %809 = vmatpush1.msra.mxu0 0.0
        %810 = vmatprep.subr.mxu0 0.0
        %811 = vmatpush1.msra.mxu0 0.0
        %812 = vmatprep.subr.mxu0 0.0
        %813 = vmatpush1.msra.mxu0 0.0
        %814 = vmatprep.subr.mxu0 0.0
        %815 = vmatpush1.msra.mxu0 0.0
        %816 = vmatprep.subr.mxu0 0.0
        %817 = vmatpush1.msra.mxu0 0.0
        %818 = vmatprep.subr.mxu0 0.0
        %819 = vmatpush1.msra.mxu0 0.0
        %820 = vmatprep.subr.mxu0 0.0
        %821 = vmatpush1.msra.mxu0 0.0
        %822 = vmatprep.subr.mxu0 0.0
        %823 = vmatpush1.msra.mxu0 0.0
        %824 = vmatprep.subr.mxu0 0.0
        %825 = vmatpush1.msra.mxu0 0.0
        %826 = vmatprep.subr.mxu0 0.0
        %827 = vmatpush1.msra.mxu0 0.0
        %828 = vmatprep.subr.mxu0 0.0
        %829 = vmatpush1.msra.mxu0 0.0
        %830 = vmatprep.subr.mxu0 0.0
        %831 = vmatpush1.msra.mxu0 0.0
        %832 = vmatprep.subr.mxu0 0.0
        %833 = vmatpush1.msra.mxu0 0.0
        %834 = vmatprep.subr.mxu0 0.0
        %835 = vmatpush1.msra.mxu0 0.0
        %836 = vmatprep.subr.mxu0 0.0
        %837 = vmatpush1.msra.mxu0 0.0
        %838 = vmatprep.subr.mxu0 0.0
        %839 = vmatpush1.msra.mxu0 0.0
        %840 = vmatprep.subr.mxu0 0.0
        %841 = vmatpush1.msra.mxu0 0.0
        %842 = vmatprep.subr.mxu0 0.0
        %843 = vmatpush1.msra.mxu0 0.0
        %844 = vmatprep.subr.mxu0 0.0
        %845 = vmatpush1.msra.mxu0 0.0
        %846 = vmatprep.subr.mxu0 0.0
        %847 = vmatpush1.msra.mxu0 0.0
        %848 = vmatprep.subr.mxu0 0.0
        %849 = vmatpush1.msra.mxu0 0.0
        %850 = vmatprep.subr.mxu0 0.0
        %851 = vmatpush1.msra.mxu0 0.0
        %852 = vmatprep.subr.mxu0 0.0
        %853 = vmatpush1.msra.mxu0 0.0
        %854 = vmatprep.subr.mxu0 0.0
        %855 = vmatpush1.msra.mxu0 0.0
        %856 = vmatprep.mubr.f32.mxu0 0.0
        %857 = vmatmul.mubr.f32.gmra.mrb[0].mxu0 %v354
        %v858 = vpop.f32.mrb[0].mxu0
        %v859 = vadd.f32 0.0, %v858
        %v860 = vpop.f32.mrb[0].mxu0
        %861 = vmatprep.mubr.f32.mxu0 0.0
        %862 = vmatmul.mubr.f32.gmra.mrb[0].mxu0 %v357
        %v863 = vpop.f32.mrb[0].mxu0
        %v864 = vadd.f32 0.0, %v863
        %v865 = vpop.f32.mrb[0].mxu0
        %866 = vdwg.mxu0
        %v867 = vsub.f32 %v859, %v707
        %v868 = vsub.f32 %v864, %v712
        %871 = vrot.lane.b32.xlu0 %v707, 32
        %v872 = vpop.permute.xlu0 %871
        %873 = vrot.lane.b32.xlu0 %v712, 32
        %v874 = vpop.permute.xlu0 %873
        %879 = vrot.lane.b32.xlu0 %v790, 64
        %v880 = vpop.permute.xlu0 %879
        %881 = vrot.lane.b32.xlu0 %v791, 64
        %v882 = vpop.permute.xlu0 %881
        %887 = vrot.lane.b32.xlu0 %v867, 96
        %v888 = vpop.permute.xlu0 %887
        %889 = vrot.lane.b32.xlu0 %v868, 96
        %v890 = vpop.permute.xlu0 %889
        %vm893 = vcmask 261120
        %v894 = vsel %vm893, %v638, %v872
        %v895 = vsel %vm893, %v639, %v874
        %vm896 = vcmask 523264
        %v897 = vsel %vm896, %v894, %v880
        %v898 = vsel %vm896, %v895, %v882
        %vm899 = vcmask 785408
        %v900 = vsel %vm899, %v897, %v888
        %v901 = vsel %vm899, %v898, %v890
        %v902 = vld [vmem:[#allocation2] sm:$0xff]
        %v903 = vld [vmem:[#allocation2 + $0x8] sm:$0xff]
        %v904 = vld [vmem:[#allocation2 + $0x10] sm:$0xff]
        %v905 = vld [vmem:[#allocation2 + $0x18] sm:$0xff]
        %v906 = vld [vmem:[#allocation2 + $0x20] sm:$0xff]
        %v907 = vld [vmem:[#allocation2 + $0x28] sm:$0xff]
        %v908 = vld [vmem:[#allocation2 + $0x30] sm:$0xff]
        %v909 = vld [vmem:[#allocation2 + $0x38] sm:$0xff]
        %v910 = vld [vmem:[#allocation2 + $0x40] sm:$0xff]
        %v911 = vld [vmem:[#allocation2 + $0x48] sm:$0xff]
        %v912 = vld [vmem:[#allocation2 + $0x50] sm:$0xff]
        %v913 = vld [vmem:[#allocation2 + $0x58] sm:$0xff]
        %v914 = vld [vmem:[#allocation2 + $0x60] sm:$0xff]
        %v915 = vld [vmem:[#allocation2 + $0x68] sm:$0xff]
        %v916 = vld [vmem:[#allocation2 + $0x70] sm:$0xff]
        %v917 = vld [vmem:[#allocation2 + $0x78] sm:$0xff]
        %v918 = vld [vmem:[%s5] sm:$0x1]
        %v920 = vlaneseq
        %v921 = vshrl.u32 %v920, 7
        %v922 = vsub.s32 0, %v921
        %v923 = vrot.slane %v918, %v922
        %925 = vmatprep.subr.mxu0 0.0
        %926 = vmatpush1.msra.mxu0 %v902
        %927 = vmatprep.subr.mxu0 0.0
        %928 = vmatpush1.msra.mxu0 %v903
        %929 = vmatprep.subr.mxu0 0.0
        %930 = vmatpush1.msra.mxu0 %v904
        %931 = vmatprep.subr.mxu0 0.0
        %932 = vmatpush1.msra.mxu0 %v905
        %933 = vmatprep.subr.mxu0 0.0
        %934 = vmatpush1.msra.mxu0 %v906
        %935 = vmatprep.subr.mxu0 0.0
        %936 = vmatpush1.msra.mxu0 %v907
        %937 = vmatprep.subr.mxu0 0.0
        %938 = vmatpush1.msra.mxu0 %v908
        %939 = vmatprep.subr.mxu0 0.0
        %940 = vmatpush1.msra.mxu0 %v909
        %941 = vmatprep.subr.mxu0 0.0
        %942 = vmatpush1.msra.mxu0 %v910
        %943 = vmatprep.subr.mxu0 0.0
        %944 = vmatpush1.msra.mxu0 %v911
        %945 = vmatprep.subr.mxu0 0.0
        %946 = vmatpush1.msra.mxu0 %v912
        %947 = vmatprep.subr.mxu0 0.0
        %948 = vmatpush1.msra.mxu0 %v913
        %949 = vmatprep.subr.mxu0 0.0
        %950 = vmatpush1.msra.mxu0 %v914
        %951 = vmatprep.subr.mxu0 0.0
        %952 = vmatpush1.msra.mxu0 %v915
        %953 = vmatprep.subr.mxu0 0.0
        %954 = vmatpush1.msra.mxu0 %v916
        %955 = vmatprep.subr.mxu0 0.0
        %956 = vmatpush1.msra.mxu0 %v917
        %957 = vmatprep.subr.mxu0 0.0
        %958 = vmatpush1.msra.mxu0 0.0
        %959 = vmatprep.subr.mxu0 0.0
        %960 = vmatpush1.msra.mxu0 0.0
        %961 = vmatprep.subr.mxu0 0.0
        %962 = vmatpush1.msra.mxu0 0.0
        %963 = vmatprep.subr.mxu0 0.0
        %964 = vmatpush1.msra.mxu0 0.0
        %965 = vmatprep.subr.mxu0 0.0
        %966 = vmatpush1.msra.mxu0 0.0
        %967 = vmatprep.subr.mxu0 0.0
        %968 = vmatpush1.msra.mxu0 0.0
        %969 = vmatprep.subr.mxu0 0.0
        %970 = vmatpush1.msra.mxu0 0.0
        %971 = vmatprep.subr.mxu0 0.0
        %972 = vmatpush1.msra.mxu0 0.0
        %973 = vmatprep.subr.mxu0 0.0
        %974 = vmatpush1.msra.mxu0 0.0
        %975 = vmatprep.subr.mxu0 0.0
        %976 = vmatpush1.msra.mxu0 0.0
        %977 = vmatprep.subr.mxu0 0.0
        %978 = vmatpush1.msra.mxu0 0.0
        %979 = vmatprep.subr.mxu0 0.0
        %980 = vmatpush1.msra.mxu0 0.0
        %981 = vmatprep.subr.mxu0 0.0
        %982 = vmatpush1.msra.mxu0 0.0
        %983 = vmatprep.subr.mxu0 0.0
        %984 = vmatpush1.msra.mxu0 0.0
        %985 = vmatprep.subr.mxu0 0.0
        %986 = vmatpush1.msra.mxu0 0.0
        %987 = vmatprep.subr.mxu0 0.0
        %988 = vmatpush1.msra.mxu0 0.0
        %989 = vmatprep.mubr.f32.mxu0 0.0
        %990 = vmatmul.mubr.f32.gmra.mrb[0].mxu0 %v900
        %v991 = vpop.f32.mrb[0].mxu0
        %v992 = vadd.f32 %v923, %v991
        %v993 = vpop.f32.mrb[0].mxu0
        %994 = vmatprep.mubr.f32.mxu0 0.0
        %995 = vmatmul.mubr.f32.gmra.mrb[0].mxu0 %v901
        %v996 = vpop.f32.mrb[0].mxu0
        %v997 = vadd.f32 %v923, %v996
        %v998 = vpop.f32.mrb[0].mxu0
        %999 = vdwg.mxu0
        %v1000 = vmax.f32 %v992, 0.0
        %v1001 = vmax.f32 %v997, 0.0
        %1002 = vst [vmem:[%s259] sm:$0xff] %v1000
        %1003 = vst [vmem:[%s259 + $0x8] sm:$0xff] %v1001
        %s1004 = sand.u32 %s160, 1
        %s1005 = scalar_lea.sflag [#allocation4], %s1004
        %s1006 = sand.u32 %s160, 1
        %s1007 = smul.addr %s1006, 16
        %s1008 = scalar_lea.vmem [#allocation5], %s1007
        // Predicated region
        $region49: #{tpu_custom_call.1} parent=43 // pred_check
          %p1009 = pneg %p170
        $region50: #{tpu_custom_call.1} parent=43 // pred_check_branch
          %1011 = sbr.rel (%p1009) target = $region52
        $region51: #{tpu_custom_call.1} parent=43 // pred_region
          %s1013 = ssub.s32 256, 256
          %1014 = vsyncadd %s1005, %s1013
          %s1015 = smul.addr %s21, 2
          %s1016 = smul.addr %s1015, 128
          %s1017 = scalar_lea.hbm %s6, %s1016
          %s1018 = sshll.u32 %s1008, 4
          %s1019 = int_to_ptr.vmem [resolvable:$true] %s1018
          %1024 = dma.vmem_to_hbm [thread:$0]  %s1019, 256, %s1017, %s1005, 128, 128, 8
        $region52: #{tpu_custom_call.1} parent=43 // pred_fallthru
          _
      $region44: #{tpu_custom_call.1} parent=5 // pred_fallthru
        _
      %p1025 = scmp.le.s32.totalorder 2, %s16
      // Predicated region
      $region53: #{tpu_custom_call.1} parent=5 // pred_check
        %p1026 = pneg %p1025
      $region54: #{tpu_custom_call.1} parent=5 // pred_check_branch
        %1028 = sbr.rel (%p1026) target = $region56
      $region55: #{tpu_custom_call.1} parent=5 // pred_region
        %s1029 = ssub.s32 %s16, 2
        // Predicated region
        $region57: #{tpu_custom_call.1} parent=55 // pred_check
          %p1030 = pneg %p176
        $region58: #{tpu_custom_call.1} parent=55 // pred_check_branch
          %1032 = sbr.rel (%p1030) target = $region60
        $region59: #{tpu_custom_call.1} parent=55 // pred_region
          %s1033 = sand.u32 %s161, 1
          %s1034 = scalar_lea.sflag [#allocation4], %s1033
          %s1035 = sand.u32 %s161, 1
          %s1036 = smul.addr %s1035, 16
          %s1037 = scalar_lea.vmem [#allocation5], %s1036
          %1038 = dma.done %s1034, 256
        $region60: #{tpu_custom_call.1} parent=55 // pred_fallthru
          _
      $region56: #{tpu_custom_call.1} parent=5 // pred_fallthru
        _
    $region6: #{tpu_custom_call.1} parent=1 // loop_footer
      %s20 = sadd.s32 1, %s16
    $region7: #{tpu_custom_call.1} parent=1 // loop_footer_branch
      %15 = sbr.rel target = $region3
    $region8: #{tpu_custom_call.1} parent=1 // loop_exit
      _
    %1039 = vsyncpa [#allocation3], 1
    %s1040 = scalar_lea.sflag [#allocation3], 1
    %1041 = vsyncpa %s1040, 1
    %1042 = vsyncpa [#allocation4], 1
    %s1043 = scalar_lea.sflag [#allocation4], 1
    %1044 = vsyncpa %s1043, 1

</llo_original>
